<compile_context>
chip_gen: v6e
topology: v6e:2x2x1
jax: 0.10.0
libtpu: 0.0.40
codegen_flags: <defaults>
</compile_context>

<pallas_src>
import functools

import jax
import jax.numpy as jnp
from jax.experimental import pallas as pl
from jax.experimental.pallas import tpu as pltpu

BN_EPS = 1e-5
LANE = 128       # lane width: pad feature dims to a multiple of this
SUBLANE = 16     # bf16 sublane packing: pad node dim to a multiple of this


def _round_up(x, m):
    return (x + m - 1) // m * m


# ----------------------------------------------------------------------------
# Fused kernel: all GCN layers in one pallas_call
# ----------------------------------------------------------------------------
def _gcn_fused_kernel(x_ref, adj_ref, w_ref, b_ref, cls_mask_ref, o_ref, *,
                      num_layers):
    """x_ref: [Np, Fp] bf16, adj_ref: [Np, Np] bf16, w_ref: [L, Fp, Fp] bf16,
    b_ref: [L, 1, Fp] f32 (BN folded), cls_mask_ref: [1, Fp] f32 additive mask,
    o_ref: [Np, Fp] f32 log-probabilities (padded class columns ~ -inf)."""
    adj = adj_ref[...]                      # loaded once, reused for every layer
    h = x_ref[...]
    for i in range(num_layers):             # static unroll over layers
        support = jnp.dot(h, w_ref[i], preferred_element_type=jnp.float32)
        z = jnp.dot(adj, support.astype(adj.dtype),
                    preferred_element_type=jnp.float32)
        z = z + b_ref[i]                    # bias (BN already folded in) , f32
        if i < num_layers - 1:
            # ReLU in f32, cast back to compute dtype for the next MXU pass.
            h = jnp.maximum(z, 0.0).astype(h.dtype)
        else:
            # Final layer: mask padded class columns, then log_softmax (f32).
            z = z + cls_mask_ref[...]
            m = jnp.max(z, axis=-1, keepdims=True)
            lse = jnp.log(jnp.sum(jnp.exp(z - m), axis=-1, keepdims=True)) + m
            o_ref[...] = z - lse


# ----------------------------------------------------------------------------
# Wrapper: BN folding, padding, single pallas_call
# ----------------------------------------------------------------------------
def _full_spec(shape):
    return pl.BlockSpec(shape, lambda: tuple(0 for _ in shape))


def gcn_forward_fused(params, x, adj, *, compute_dtype=jnp.bfloat16):
    num_layers = len(params["convs"])
    n, nfeat = x.shape
    nclass = params["convs"][-1]["w"].shape[1]

    dims = [nfeat] + [params["convs"][i]["w"].shape[1] for i in range(num_layers)]
    fp = _round_up(max(dims), LANE)          # common lane-dense feature width
    np_ = _round_up(n, SUBLANE)              # padded node count

    # Fold eval-mode BatchNorm into each hidden layer's W / b, then zero-pad.
    w_stack, b_stack = [], []
    for i in range(num_layers):
        w = params["convs"][i]["w"].astype(jnp.float32)
        b = params["convs"][i]["b"].astype(jnp.float32)
        if i < num_layers - 1:
            bn = params["bns"][i]
            s = bn["gamma"] * jax.lax.rsqrt(bn["running_var"] + BN_EPS)
            w = w * s[None, :]                               # column scale
            b = (b - bn["running_mean"]) * s + bn["beta"]    # folded shift
        f_in, f_out = w.shape
        w_stack.append(jnp.zeros((fp, fp), jnp.float32).at[:f_in, :f_out].set(w))
        b_stack.append(jnp.zeros((1, fp), jnp.float32).at[0, :f_out].set(b))
    w_all = jnp.stack(w_stack).astype(compute_dtype)   # [L, Fp, Fp] bf16
    b_all = jnp.stack(b_stack)                          # [L, 1, Fp]  f32

    # Additive mask: 0 for real classes, -1e30 for padded class columns.
    cls_mask = jnp.where(jnp.arange(fp) < nclass, 0.0, -1e30)
    cls_mask = cls_mask.astype(jnp.float32)[None, :]

    # Zero-padded, bf16 MXU inputs.
    x_pad = jnp.zeros((np_, fp), compute_dtype).at[:n, :nfeat].set(
        x.astype(compute_dtype))
    adj_pad = jnp.zeros((np_, np_), compute_dtype).at[:n, :n].set(
        adj.astype(compute_dtype))

    flops = num_layers * (2 * np_ * fp * fp + 2 * np_ * np_ * fp)
    bytes_accessed = (
        2 * (x_pad.size + adj_pad.size + w_all.size)          # bf16 inputs
        + 4 * (b_all.size + cls_mask.size + np_ * fp))        # f32 bias/mask/out
    cost = pl.CostEstimate(flops=flops, transcendentals=np_ * fp,
                           bytes_accessed=bytes_accessed)

    kernel = functools.partial(_gcn_fused_kernel, num_layers=num_layers)

    out = pl.pallas_call(
        kernel,
        out_shape=jax.ShapeDtypeStruct((np_, fp), jnp.float32),
        in_specs=[
            _full_spec((np_, fp)),               # x  (padded, bf16)
            _full_spec((np_, np_)),              # adj (padded, bf16)
            _full_spec((num_layers, fp, fp)),    # stacked folded weights
            _full_spec((num_layers, 1, fp)),     # stacked folded biases
            _full_spec((1, fp)),                 # class mask
        ],
        out_specs=_full_spec((np_, fp)),         # lane-dense (Fp = 128k) output
        compiler_params=pltpu.CompilerParams(
            vmem_limit_bytes=32 * 1024 * 1024),
        cost_estimate=cost,
    )(x_pad, adj_pad, w_all, b_all, cls_mask)

    return out[:n, :nclass]                      # strip node / class padding


@jax.jit
def gcn_forward(params, x, adj):
    return gcn_forward_fused(params, x, adj)


# ----------------------------------------------------------------------------
# Pure-JAX reference with matching numerics (bf16 MXU inputs, f32 accumulate)
# ----------------------------------------------------------------------------
def gcn_reference(params, x, adj, compute_dtype=jnp.bfloat16):
    num_layers = len(params["convs"])
    h = x.astype(compute_dtype)
    adj_c = adj.astype(compute_dtype)
    for i in range(num_layers):
        w = params["convs"][i]["w"].astype(jnp.float32)
        b = params["convs"][i]["b"].astype(jnp.float32)
        if i < num_layers - 1:
            bn = params["bns"][i]
            s = bn["gamma"] * jax.lax.rsqrt(bn["running_var"] + BN_EPS)
            w = w * s[None, :]
            b = (b - bn["running_mean"]) * s + bn["beta"]
        support = jnp.dot(h, w.astype(compute_dtype),
                          preferred_element_type=jnp.float32)
        z = jnp.dot(adj_c, support.astype(compute_dtype),
                    preferred_element_type=jnp.float32) + b
        if i < num_layers - 1:
            h = jnp.maximum(z, 0.0).astype(compute_dtype)
        else:
            return jax.nn.log_softmax(z, axis=-1)


# ----------------------------------------------------------------------------
# Parameter construction (mirrors GCN.__init__ shapes, Kipf GraphConvolution)
# ----------------------------------------------------------------------------
def init_gcn_params(key, nfeat, nhid, num_layers, nclass):
    dims = [nfeat] + [nhid] * (num_layers - 1) + [nclass]
    params = {"convs": [], "bns": []}
    for i in range(num_layers):
        f_in, f_out = dims[i], dims[i + 1]
        key, kw, kb = jax.random.split(key, 3)
        stdv = 1.0 / jnp.sqrt(jnp.float32(f_out))
        w = jax.random.uniform(kw, (f_in, f_out), jnp.float32, -stdv, stdv)
        b = jax.random.uniform(kb, (f_out,), jnp.float32, -stdv, stdv)
        params["convs"].append({"w": w, "b": b})
    for _ in range(num_layers - 1):
        params["bns"].append({
            "gamma": jnp.ones((nhid,), jnp.float32),
            "beta": jnp.zeros((nhid,), jnp.float32),
            "running_mean": jnp.zeros((nhid,), jnp.float32),
            "running_var": jnp.ones((nhid,), jnp.float32),
        })
    return params


# ----------------------------------------------------------------------------
if __name__ == "__main__":
    N, NFEAT, NHID, NCLASS, NUM_LAYERS = 8, 16, 32, 8, 3

    key = jax.random.PRNGKey(0)
    key, kx, ka = jax.random.split(key, 3)

    x = jax.random.normal(kx, (N, NFEAT), jnp.float32)

    # Symmetric adjacency with self-loops, row-normalized (dense).
    a = (jax.random.uniform(ka, (N, N)) > 0.6).astype(jnp.float32)
    a = jnp.maximum(a, a.T) + jnp.eye(N, dtype=jnp.float32)
    adj = a / jnp.sum(a, axis=1, keepdims=True)

    params = init_gcn_params(key, NFEAT, NHID, NUM_LAYERS, NCLASS)

    out = gcn_forward(params, x, adj)
    out = jax.block_until_ready(out)

    assert out.shape == (N, NCLASS)
    # log_softmax rows must exponentiate-sum to 1.
    assert jnp.allclose(jnp.sum(jnp.exp(out), axis=-1), 1.0, atol=1e-4)
    # Match the pure-JAX reference (same bf16/f32 numerics).
    ref = gcn_reference(params, x, adj)
    assert jnp.allclose(out, ref, atol=1e-2, rtol=1e-2)
    print("KERNEL_OK")
</pallas_src>

<mosaic_0001>
module attributes {stable_mosaic.version = 11 : i64} {
  func.func @_gcn_fused_kernel(%arg0: memref<16x128xbf16, #tpu.memory_space<vmem>>, %arg1: memref<16x16xbf16, #tpu.memory_space<vmem>>, %arg2: memref<3x128x128xbf16, #tpu.memory_space<vmem>>, %arg3: memref<3x1x128xf32, #tpu.memory_space<vmem>>, %arg4: memref<1x128xf32, #tpu.memory_space<vmem>>, %arg5: memref<16x128xf32, #tpu.memory_space<vmem>>) attributes {dimension_semantics = [], scalar_prefetch = 0 : i64, scratch_operands = 0 : i64, tpu.core_type = #tpu.core_type<tc>} {
    %c0 = arith.constant 0 : index
    %c0_0 = arith.constant 0 : index
    %0 = vector.load %arg1[%c0, %c0_0] : memref<16x16xbf16, #tpu.memory_space<vmem>>, vector<16x16xbf16>
    %c0_1 = arith.constant 0 : index
    %c0_2 = arith.constant 0 : index
    %1 = vector.load %arg0[%c0_1, %c0_2] : memref<16x128xbf16, #tpu.memory_space<vmem>>, vector<16x128xbf16>
    %c0_3 = arith.constant 0 : index
    %c0_4 = arith.constant 0 : index
    %c0_5 = arith.constant 0 : index
    %2 = vector.load %arg2[%c0_3, %c0_4, %c0_5] : memref<3x128x128xbf16, #tpu.memory_space<vmem>>, vector<1x128x128xbf16>
    %3 = vector.shape_cast %2 : vector<1x128x128xbf16> to vector<128x128xbf16>
    %cst = arith.constant dense<0.000000e+00> : vector<16x128xf32>
    %4 = tpu.matmul %1, %3, %cst {dimension_numbers = #tpu.dot_dimension_numbers<[1], [0], [0], [1], [0, 0, 1, 1], [], []>} : vector<16x128xbf16>, vector<128x128xbf16>, vector<16x128xf32> -> vector<16x128xf32>
    %5 = arith.truncf %4 : vector<16x128xf32> to vector<16x128xbf16>
    %cst_6 = arith.constant dense<0.000000e+00> : vector<16x128xf32>
    %6 = tpu.matmul %0, %5, %cst_6 {dimension_numbers = #tpu.dot_dimension_numbers<[1], [0], [0], [1], [0, 0, 1, 1], [], []>} : vector<16x16xbf16>, vector<16x128xbf16>, vector<16x128xf32> -> vector<16x128xf32>
    %c0_7 = arith.constant 0 : index
    %c0_8 = arith.constant 0 : index
    %c0_9 = arith.constant 0 : index
    %7 = vector.load %arg3[%c0_7, %c0_8, %c0_9] : memref<3x1x128xf32, #tpu.memory_space<vmem>>, vector<1x1x128xf32>
    %8 = vector.shape_cast %7 : vector<1x1x128xf32> to vector<1x128xf32>
    %9 = vector.broadcast %8 : vector<1x128xf32> to vector<16x128xf32>
    %10 = arith.addf %6, %9 : vector<16x128xf32>
    %cst_10 = arith.constant 0.000000e+00 : f32
    %11 = vector.broadcast %cst_10 : f32 to vector<16x128xf32>
    %12 = arith.maximumf %10, %11 : vector<16x128xf32>
    %13 = arith.truncf %12 : vector<16x128xf32> to vector<16x128xbf16>
    %c1 = arith.constant 1 : index
    %c0_11 = arith.constant 0 : index
    %c0_12 = arith.constant 0 : index
    %14 = vector.load %arg2[%c1, %c0_11, %c0_12] : memref<3x128x128xbf16, #tpu.memory_space<vmem>>, vector<1x128x128xbf16>
    %15 = vector.shape_cast %14 : vector<1x128x128xbf16> to vector<128x128xbf16>
    %cst_13 = arith.constant dense<0.000000e+00> : vector<16x128xf32>
    %16 = tpu.matmul %13, %15, %cst_13 {dimension_numbers = #tpu.dot_dimension_numbers<[1], [0], [0], [1], [0, 0, 1, 1], [], []>} : vector<16x128xbf16>, vector<128x128xbf16>, vector<16x128xf32> -> vector<16x128xf32>
    %17 = arith.truncf %16 : vector<16x128xf32> to vector<16x128xbf16>
    %cst_14 = arith.constant dense<0.000000e+00> : vector<16x128xf32>
    %18 = tpu.matmul %0, %17, %cst_14 {dimension_numbers = #tpu.dot_dimension_numbers<[1], [0], [0], [1], [0, 0, 1, 1], [], []>} : vector<16x16xbf16>, vector<16x128xbf16>, vector<16x128xf32> -> vector<16x128xf32>
    %c1_15 = arith.constant 1 : index
    %c0_16 = arith.constant 0 : index
    %c0_17 = arith.constant 0 : index
    %19 = vector.load %arg3[%c1_15, %c0_16, %c0_17] : memref<3x1x128xf32, #tpu.memory_space<vmem>>, vector<1x1x128xf32>
    %20 = vector.shape_cast %19 : vector<1x1x128xf32> to vector<1x128xf32>
    %21 = vector.broadcast %20 : vector<1x128xf32> to vector<16x128xf32>
    %22 = arith.addf %18, %21 : vector<16x128xf32>
    %cst_18 = arith.constant 0.000000e+00 : f32
    %23 = vector.broadcast %cst_18 : f32 to vector<16x128xf32>
    %24 = arith.maximumf %22, %23 : vector<16x128xf32>
    %25 = arith.truncf %24 : vector<16x128xf32> to vector<16x128xbf16>
    %c2 = arith.constant 2 : index
    %c0_19 = arith.constant 0 : index
    %c0_20 = arith.constant 0 : index
    %26 = vector.load %arg2[%c2, %c0_19, %c0_20] : memref<3x128x128xbf16, #tpu.memory_space<vmem>>, vector<1x128x128xbf16>
    %27 = vector.shape_cast %26 : vector<1x128x128xbf16> to vector<128x128xbf16>
    %cst_21 = arith.constant dense<0.000000e+00> : vector<16x128xf32>
    %28 = tpu.matmul %25, %27, %cst_21 {dimension_numbers = #tpu.dot_dimension_numbers<[1], [0], [0], [1], [0, 0, 1, 1], [], []>} : vector<16x128xbf16>, vector<128x128xbf16>, vector<16x128xf32> -> vector<16x128xf32>
    %29 = arith.truncf %28 : vector<16x128xf32> to vector<16x128xbf16>
    %cst_22 = arith.constant dense<0.000000e+00> : vector<16x128xf32>
    %30 = tpu.matmul %0, %29, %cst_22 {dimension_numbers = #tpu.dot_dimension_numbers<[1], [0], [0], [1], [0, 0, 1, 1], [], []>} : vector<16x16xbf16>, vector<16x128xbf16>, vector<16x128xf32> -> vector<16x128xf32>
    %c2_23 = arith.constant 2 : index
    %c0_24 = arith.constant 0 : index
    %c0_25 = arith.constant 0 : index
    %31 = vector.load %arg3[%c2_23, %c0_24, %c0_25] : memref<3x1x128xf32, #tpu.memory_space<vmem>>, vector<1x1x128xf32>
    %32 = vector.shape_cast %31 : vector<1x1x128xf32> to vector<1x128xf32>
    %33 = vector.broadcast %32 : vector<1x128xf32> to vector<16x128xf32>
    %34 = arith.addf %30, %33 : vector<16x128xf32>
    %c0_26 = arith.constant 0 : index
    %c0_27 = arith.constant 0 : index
    %35 = vector.load %arg4[%c0_26, %c0_27] : memref<1x128xf32, #tpu.memory_space<vmem>>, vector<1x128xf32>
    %36 = vector.broadcast %35 : vector<1x128xf32> to vector<16x128xf32>
    %37 = arith.addf %34, %36 : vector<16x128xf32>
    %cst_28 = arith.constant dense<0xFF800000> : vector<16xf32>
    %38 = vector.multi_reduction <maximumf>, %37, %cst_28 [1] : vector<16x128xf32> to vector<16xf32>
    %39 = vector.shape_cast %38 : vector<16xf32> to vector<16x1xf32>
    %40 = vector.broadcast %39 : vector<16x1xf32> to vector<16x128xf32>
    %41 = arith.subf %37, %40 : vector<16x128xf32>
    %42 = math.exp %41 : vector<16x128xf32>
    %cst_29 = arith.constant dense<0.000000e+00> : vector<16xf32>
    %43 = vector.multi_reduction <add>, %42, %cst_29 [1] : vector<16x128xf32> to vector<16xf32>
    %44 = vector.shape_cast %43 : vector<16xf32> to vector<16x1xf32>
    %45 = math.log %44 : vector<16x1xf32>
    %46 = arith.addf %45, %39 : vector<16x1xf32>
    %47 = vector.broadcast %46 : vector<16x1xf32> to vector<16x128xf32>
    %48 = arith.subf %37, %47 : vector<16x128xf32>
    %c0_30 = arith.constant 0 : index
    %c0_31 = arith.constant 0 : index
    %49 = vector.load %arg5[%c0_30, %c0_31] : memref<16x128xf32, #tpu.memory_space<vmem>>, vector<16x128xf32>
    tpu.vector_store %arg5[%c0_30, %c0_31], %48 {strides = array<i32>} : memref<16x128xf32, #tpu.memory_space<vmem>>, vector<16x128xf32>,
    return
  }
}

</mosaic_0001>

<llo_original>
// kernel: gcn_forward.1
$region0: #{gcn_forward.1}
  #allocation0 [shape = 'u32[]', space=smem, size = 0x4, offset = 0x4, fixed_abs, tag = 'smem constant byte address 0x4 - core index']
  #allocation1 [shape = 'u32[144,128]{1,0:T(1,128)}', space=vmem, size = 0x12000, scoped, tag = 'internal scratch']
  %s0 = inlined_call_operand.vmem [shape: bf16[16,128], index: 0, kind: input, shape index: {}]
  %s1 = inlined_call_operand.vmem [shape: bf16[16,16], index: 1, kind: input, shape index: {}]
  %s2 = inlined_call_operand.vmem [shape: bf16[3,128,128], index: 2, kind: input, shape index: {}]
  %s3 = inlined_call_operand.vmem [shape: f32[3,1,128], index: 3, kind: input, shape index: {}]
  %s4 = inlined_call_operand.vmem [shape: f32[1,128], index: 4, kind: input, shape index: {}]
  %s5 = inlined_call_operand.vmem [shape: f32[16,128], index: 5, kind: output, shape index: {}]
  %s6 = sld [smem:[#allocation0]]
  $region30: #{gcn_forward.1} parent=0
    _
  %s8 = ssub.s32 1, %s6
  %s9 = scalar_select 0, %s8, %s6
  // Predicated region
  $region2: #{gcn_forward.1} parent=0 // pred_check
    _
  $region3: #{gcn_forward.1} parent=0 // pred_check_branch
    %11 = sbr.rel (0) target = $region5
  $region4: #{gcn_forward.1} parent=0 // pred_region
    _
  $region5: #{gcn_forward.1} parent=0 // pred_fallthru
    _
  // Predicated region
  $region6: #{gcn_forward.1} parent=0 // pred_check
    _
  $region7: #{gcn_forward.1} parent=0 // pred_check_branch
    %13 = sbr.rel (0) target = $region9
  $region8: #{gcn_forward.1} parent=0 // pred_region
    _
  $region9: #{gcn_forward.1} parent=0 // pred_fallthru
    _
  // Predicated region
  $region10: #{gcn_forward.1} parent=0 // pred_check
    _
  $region11: #{gcn_forward.1} parent=0 // pred_check_branch
    %15 = sbr.rel (0) target = $region13
  $region12: #{gcn_forward.1} parent=0 // pred_region
    _
  $region13: #{gcn_forward.1} parent=0 // pred_fallthru
    _
  // Predicated region
  $region14: #{gcn_forward.1} parent=0 // pred_check
    _
  $region15: #{gcn_forward.1} parent=0 // pred_check_branch
    %17 = sbr.rel (0) target = $region17
  $region16: #{gcn_forward.1} parent=0 // pred_region
    _
  $region17: #{gcn_forward.1} parent=0 // pred_fallthru
    _
  // Predicated region
  $region18: #{gcn_forward.1} parent=0 // pred_check
    _
  $region19: #{gcn_forward.1} parent=0 // pred_check_branch
    %19 = sbr.rel (0) target = $region21
  $region20: #{gcn_forward.1} parent=0 // pred_region
    _
  $region21: #{gcn_forward.1} parent=0 // pred_fallthru
    _
  %v21 = vld [vmem:[%s1] sm:$0xf]
  %v22 = vld [vmem:[%s1 + $0x4] sm:$0xf]
  %v23 = vld [vmem:[%s0] sm:$0xf]
  %v24 = vld [vmem:[%s0 + $0x4] sm:$0xf]
  %v25 = vld [vmem:[%s2] sm:$0xf]
  %v26 = vld [vmem:[%s2 + $0x4] sm:$0xf]
  %v27 = vld [vmem:[%s2 + $0x8] sm:$0xf]
  %v28 = vld [vmem:[%s2 + $0xc] sm:$0xf]
  %v29 = vld [vmem:[%s2 + $0x10] sm:$0xf]
  %v30 = vld [vmem:[%s2 + $0x14] sm:$0xf]
  %v31 = vld [vmem:[%s2 + $0x18] sm:$0xf]
  %v32 = vld [vmem:[%s2 + $0x1c] sm:$0xf]
  %v33 = vld [vmem:[%s2 + $0x20] sm:$0xf]
  %v34 = vld [vmem:[%s2 + $0x24] sm:$0xf]
  %v35 = vld [vmem:[%s2 + $0x28] sm:$0xf]
  %v36 = vld [vmem:[%s2 + $0x2c] sm:$0xf]
  %v37 = vld [vmem:[%s2 + $0x30] sm:$0xf]
  %v38 = vld [vmem:[%s2 + $0x34] sm:$0xf]
  %v39 = vld [vmem:[%s2 + $0x38] sm:$0xf]
  %v40 = vld [vmem:[%s2 + $0x3c] sm:$0xf]
  %v43 = vunpack.c.l.b16 %v23
  %v44 = vunpack.c.l.b16 %v24
  %v45 = vpack.c.b16 %v44, %v43
  %v63 = vunpack.c.l.b16 %v25
  %v64 = vunpack.c.l.b16 %v26
  %v65 = vunpack.c.l.b16 %v27
  %v66 = vunpack.c.l.b16 %v28
  %v67 = vunpack.c.l.b16 %v29
  %v68 = vunpack.c.l.b16 %v30
  %v69 = vunpack.c.l.b16 %v31
  %v70 = vunpack.c.l.b16 %v32
  %v71 = vunpack.c.l.b16 %v33
  %v72 = vunpack.c.l.b16 %v34
  %v73 = vunpack.c.l.b16 %v35
  %v74 = vunpack.c.l.b16 %v36
  %v75 = vunpack.c.l.b16 %v37
  %v76 = vunpack.c.l.b16 %v38
  %v77 = vunpack.c.l.b16 %v39
  %v78 = vunpack.c.l.b16 %v40
  %v79 = vpack.c.b16 %v64, %v63
  %v80 = vpack.c.b16 %v66, %v65
  %v81 = vpack.c.b16 %v68, %v67
  %v82 = vpack.c.b16 %v70, %v69
  %v83 = vpack.c.b16 %v72, %v71
  %v84 = vpack.c.b16 %v74, %v73
  %v85 = vpack.c.b16 %v76, %v75
  %v86 = vpack.c.b16 %v78, %v77
  %95 = vmatprep.subr.bf16.mxu0 0
  %96 = vmatpush1.bf16.msra.mxu0 %v86
  %97 = vmatprep.subr.bf16.mxu0 0
  %98 = vmatpush1.bf16.msra.mxu0 %v85
  %99 = vmatprep.subr.bf16.mxu0 0
  %100 = vmatpush1.bf16.msra.mxu0 %v84
  %101 = vmatprep.subr.bf16.mxu0 0
  %102 = vmatpush1.bf16.msra.mxu0 %v83
  %103 = vmatprep.subr.bf16.mxu0 0
  %104 = vmatpush1.bf16.msra.mxu0 %v82
  %105 = vmatprep.subr.bf16.mxu0 0
  %106 = vmatpush1.bf16.msra.mxu0 %v81
  %107 = vmatprep.subr.bf16.mxu0 0
  %108 = vmatpush1.bf16.msra.mxu0 %v80
  %109 = vmatprep.subr.bf16.mxu0 0
  %110 = vmatpush1.bf16.msra.mxu0 %v79
  %111 = vmatprep.subr.bf16.mxu0 0
  %112 = vmatpush2.bf16.msra.mxu0 0
  %113 = vmatprep.subr.bf16.mxu0 0
  %114 = vmatpush2.bf16.msra.mxu0 0
  %115 = vmatprep.subr.bf16.mxu0 0
  %116 = vmatpush2.bf16.msra.mxu0 0
  %117 = vmatprep.subr.bf16.mxu0 0
  %118 = vmatpush2.bf16.msra.mxu0 0
  %119 = vmatprep.subr.bf16.mxu0 0
  %120 = vmatpush2.bf16.msra.mxu0 0
  %121 = vmatprep.subr.bf16.mxu0 0
  %122 = vmatpush2.bf16.msra.mxu0 0
  %123 = vmatprep.subr.bf16.mxu0 0
  %124 = vmatpush2.bf16.msra.mxu0 0
  %125 = vmatprep.subr.bf16.mxu0 0
  %126 = vmatpush2.bf16.msra.mxu0 0
  %127 = vmatprep.mubr.bf16.mxu0 0
  %128 = vmatmul.mubr.bf16.gmra.mxu0 %v45
  %v129 = vpop.f32.mrf.mxu0
  %v130 = vadd.f32 0.0, %v129
  %v131 = vpop.f32.mrf.mxu0
  %v132 = vpop.f32.mrf.mxu0
  %v133 = vadd.f32 0.0, %v132
  %v134 = vpop.f32.mrf.mxu0
  %135 = vdwg.mxu0
  %v136 = vpack.c.bf16 %v133, %v130
  %v137 = vld [vmem:[%s3] sm:$0x1]
  %v139 = vlaneseq
  %v140 = vshrl.u32 %v139, 7
  %v141 = vsub.s32 0, %v140
  %v142 = vrot.slane %v137, %v141
  %v146 = vunpack.c.l.b16 %v21
  %v147 = vunpack.c.l.b16 %v22
  %v148 = vpack.c.b16 %v147, %v146
  %vm149 = vcmask 130048
  %v151 = vsel %vm149, %v148, 0
  %153 = vmatprep.subr.bf16.mxu0 0
  %154 = vmatpush1.bf16.msra.mxu0 0
  %155 = vmatprep.subr.bf16.mxu0 0
  %156 = vmatpush1.bf16.msra.mxu0 0
  %157 = vmatprep.subr.bf16.mxu0 0
  %158 = vmatpush1.bf16.msra.mxu0 0
  %159 = vmatprep.subr.bf16.mxu0 0
  %160 = vmatpush1.bf16.msra.mxu0 0
  %161 = vmatprep.subr.bf16.mxu0 0
  %162 = vmatpush1.bf16.msra.mxu0 0
  %163 = vmatprep.subr.bf16.mxu0 0
  %164 = vmatpush1.bf16.msra.mxu0 0
  %165 = vmatprep.subr.bf16.mxu0 0
  %166 = vmatpush1.bf16.msra.mxu0 0
  %167 = vmatprep.subr.bf16.mxu0 0
  %168 = vmatpush1.bf16.msra.mxu0 %v136
  %169 = vmatprep.subr.bf16.mxu0 0
  %170 = vmatpush2.bf16.msra.mxu0 0
  %171 = vmatprep.subr.bf16.mxu0 0
  %172 = vmatpush2.bf16.msra.mxu0 0
  %173 = vmatprep.subr.bf16.mxu0 0
  %174 = vmatpush2.bf16.msra.mxu0 0
  %175 = vmatprep.subr.bf16.mxu0 0
  %176 = vmatpush2.bf16.msra.mxu0 0
  %177 = vmatprep.subr.bf16.mxu0 0
  %178 = vmatpush2.bf16.msra.mxu0 0
  %179 = vmatprep.subr.bf16.mxu0 0
  %180 = vmatpush2.bf16.msra.mxu0 0
  %181 = vmatprep.subr.bf16.mxu0 0
  %182 = vmatpush2.bf16.msra.mxu0 0
  %183 = vmatprep.subr.bf16.mxu0 0
  %184 = vmatpush2.bf16.msra.mxu0 0
  %185 = vmatprep.mubr.bf16.mxu0 0
  %186 = vmatmul.mubr.bf16.gmra.mxu0 %v151
  %v187 = vpop.f32.mrf.mxu0
  %v188 = vadd.f32 %v142, %v187
  %v189 = vpop.f32.mrf.mxu0
  %v190 = vpop.f32.mrf.mxu0
  %v191 = vadd.f32 %v142, %v190
  %v192 = vpop.f32.mrf.mxu0
  %193 = vdwg.mxu0
  %v194 = vmax.f32 %v188, 0.0
  %v195 = vmax.f32 %v191, 0.0
  %v196 = vpack.c.bf16 %v195, %v194
  %s197 = scalar_lea.vmem %s2, 64
  %v198 = vld [vmem:[%s197] sm:$0xf]
  %v199 = vld [vmem:[%s197 + $0x4] sm:$0xf]
  %v200 = vld [vmem:[%s197 + $0x8] sm:$0xf]
  %v201 = vld [vmem:[%s197 + $0xc] sm:$0xf]
  %v202 = vld [vmem:[%s197 + $0x10] sm:$0xf]
  %v203 = vld [vmem:[%s197 + $0x14] sm:$0xf]
  %v204 = vld [vmem:[%s197 + $0x18] sm:$0xf]
  %v205 = vld [vmem:[%s197 + $0x1c] sm:$0xf]
  %v206 = vld [vmem:[%s197 + $0x20] sm:$0xf]
  %v207 = vld [vmem:[%s197 + $0x24] sm:$0xf]
  %v208 = vld [vmem:[%s197 + $0x28] sm:$0xf]
  %v209 = vld [vmem:[%s197 + $0x2c] sm:$0xf]
  %v210 = vld [vmem:[%s197 + $0x30] sm:$0xf]
  %v211 = vld [vmem:[%s197 + $0x34] sm:$0xf]
  %v212 = vld [vmem:[%s197 + $0x38] sm:$0xf]
  %v213 = vld [vmem:[%s197 + $0x3c] sm:$0xf]
  %v230 = vunpack.c.l.b16 %v198
  %v231 = vunpack.c.l.b16 %v199
  %v232 = vunpack.c.l.b16 %v200
  %v233 = vunpack.c.l.b16 %v201
  %v234 = vunpack.c.l.b16 %v202
  %v235 = vunpack.c.l.b16 %v203
  %v236 = vunpack.c.l.b16 %v204
  %v237 = vunpack.c.l.b16 %v205
  %v238 = vunpack.c.l.b16 %v206
  %v239 = vunpack.c.l.b16 %v207
  %v240 = vunpack.c.l.b16 %v208
  %v241 = vunpack.c.l.b16 %v209
  %v242 = vunpack.c.l.b16 %v210
  %v243 = vunpack.c.l.b16 %v211
  %v244 = vunpack.c.l.b16 %v212
  %v245 = vunpack.c.l.b16 %v213
  %v246 = vpack.c.b16 %v231, %v230
  %v247 = vpack.c.b16 %v233, %v232
  %v248 = vpack.c.b16 %v235, %v234
  %v249 = vpack.c.b16 %v237, %v236
  %v250 = vpack.c.b16 %v239, %v238
  %v251 = vpack.c.b16 %v241, %v240
  %v252 = vpack.c.b16 %v243, %v242
  %v253 = vpack.c.b16 %v245, %v244
  %262 = vmatprep.subr.bf16.mxu0 0
  %263 = vmatpush1.bf16.msra.mxu0 %v253
  %264 = vmatprep.subr.bf16.mxu0 0
  %265 = vmatpush1.bf16.msra.mxu0 %v252
  %266 = vmatprep.subr.bf16.mxu0 0
  %267 = vmatpush1.bf16.msra.mxu0 %v251
  %268 = vmatprep.subr.bf16.mxu0 0
  %269 = vmatpush1.bf16.msra.mxu0 %v250
  %270 = vmatprep.subr.bf16.mxu0 0
  %271 = vmatpush1.bf16.msra.mxu0 %v249
  %272 = vmatprep.subr.bf16.mxu0 0
  %273 = vmatpush1.bf16.msra.mxu0 %v248
  %274 = vmatprep.subr.bf16.mxu0 0
  %275 = vmatpush1.bf16.msra.mxu0 %v247
  %276 = vmatprep.subr.bf16.mxu0 0
  %277 = vmatpush1.bf16.msra.mxu0 %v246
  %278 = vmatprep.subr.bf16.mxu0 0
  %279 = vmatpush2.bf16.msra.mxu0 0
  %280 = vmatprep.subr.bf16.mxu0 0
  %281 = vmatpush2.bf16.msra.mxu0 0
  %282 = vmatprep.subr.bf16.mxu0 0
  %283 = vmatpush2.bf16.msra.mxu0 0
  %284 = vmatprep.subr.bf16.mxu0 0
  %285 = vmatpush2.bf16.msra.mxu0 0
  %286 = vmatprep.subr.bf16.mxu0 0
  %287 = vmatpush2.bf16.msra.mxu0 0
  %288 = vmatprep.subr.bf16.mxu0 0
  %289 = vmatpush2.bf16.msra.mxu0 0
  %290 = vmatprep.subr.bf16.mxu0 0
  %291 = vmatpush2.bf16.msra.mxu0 0
  %292 = vmatprep.subr.bf16.mxu0 0
  %293 = vmatpush2.bf16.msra.mxu0 0
  %294 = vmatprep.mubr.bf16.mxu0 0
  %295 = vmatmul.mubr.bf16.gmra.mxu0 %v196
  %v296 = vpop.f32.mrf.mxu0
  %v297 = vadd.f32 0.0, %v296
  %v298 = vpop.f32.mrf.mxu0
  %v299 = vpop.f32.mrf.mxu0
  %v300 = vadd.f32 0.0, %v299
  %v301 = vpop.f32.mrf.mxu0
  %302 = vdwg.mxu0
  %v303 = vpack.c.bf16 %v300, %v297
  %s304 = scalar_lea.vmem %s3, 1
  %v305 = vld [vmem:[%s304] sm:$0x1]
  %v307 = vlaneseq
  %v308 = vshrl.u32 %v307, 7
  %v309 = vsub.s32 0, %v308
  %v310 = vrot.slane %v305, %v309
  %312 = vmatprep.subr.bf16.mxu0 0
  %313 = vmatpush1.bf16.msra.mxu0 0
  %314 = vmatprep.subr.bf16.mxu0 0
  %315 = vmatpush1.bf16.msra.mxu0 0
  %316 = vmatprep.subr.bf16.mxu0 0
  %317 = vmatpush1.bf16.msra.mxu0 0
  %318 = vmatprep.subr.bf16.mxu0 0
  %319 = vmatpush1.bf16.msra.mxu0 0
  %320 = vmatprep.subr.bf16.mxu0 0
  %321 = vmatpush1.bf16.msra.mxu0 0
  %322 = vmatprep.subr.bf16.mxu0 0
  %323 = vmatpush1.bf16.msra.mxu0 0
  %324 = vmatprep.subr.bf16.mxu0 0
  %325 = vmatpush1.bf16.msra.mxu0 0
  %326 = vmatprep.subr.bf16.mxu0 0
  %327 = vmatpush1.bf16.msra.mxu0 %v303
  %328 = vmatprep.subr.bf16.mxu0 0
  %329 = vmatpush2.bf16.msra.mxu0 0
  %330 = vmatprep.subr.bf16.mxu0 0
  %331 = vmatpush2.bf16.msra.mxu0 0
  %332 = vmatprep.subr.bf16.mxu0 0
  %333 = vmatpush2.bf16.msra.mxu0 0
  %334 = vmatprep.subr.bf16.mxu0 0
  %335 = vmatpush2.bf16.msra.mxu0 0
  %336 = vmatprep.subr.bf16.mxu0 0
  %337 = vmatpush2.bf16.msra.mxu0 0
  %338 = vmatprep.subr.bf16.mxu0 0
  %339 = vmatpush2.bf16.msra.mxu0 0
  %340 = vmatprep.subr.bf16.mxu0 0
  %341 = vmatpush2.bf16.msra.mxu0 0
  %342 = vmatprep.subr.bf16.mxu0 0
  %343 = vmatpush2.bf16.msra.mxu0 0
  %344 = vmatprep.mubr.bf16.mxu0 0
  %345 = vmatmul.mubr.bf16.gmra.mxu0 %v151
  %v346 = vpop.f32.mrf.mxu0
  %v347 = vadd.f32 %v310, %v346
  %v348 = vpop.f32.mrf.mxu0
  %v349 = vpop.f32.mrf.mxu0
  %v350 = vadd.f32 %v310, %v349
  %v351 = vpop.f32.mrf.mxu0
  %352 = vdwg.mxu0
  %v353 = vmax.f32 %v347, 0.0
  %v354 = vmax.f32 %v350, 0.0
  %v355 = vpack.c.bf16 %v354, %v353
  %s356 = scalar_lea.vmem %s2, 128
  %v357 = vld [vmem:[%s356] sm:$0xf]
  %v358 = vld [vmem:[%s356 + $0x4] sm:$0xf]
  %v359 = vld [vmem:[%s356 + $0x8] sm:$0xf]
  %v360 = vld [vmem:[%s356 + $0xc] sm:$0xf]
  %v361 = vld [vmem:[%s356 + $0x10] sm:$0xf]
  %v362 = vld [vmem:[%s356 + $0x14] sm:$0xf]
  %v363 = vld [vmem:[%s356 + $0x18] sm:$0xf]
  %v364 = vld [vmem:[%s356 + $0x1c] sm:$0xf]
  %v365 = vld [vmem:[%s356 + $0x20] sm:$0xf]
  %v366 = vld [vmem:[%s356 + $0x24] sm:$0xf]
  %v367 = vld [vmem:[%s356 + $0x28] sm:$0xf]
  %v368 = vld [vmem:[%s356 + $0x2c] sm:$0xf]
  %v369 = vld [vmem:[%s356 + $0x30] sm:$0xf]
  %v370 = vld [vmem:[%s356 + $0x34] sm:$0xf]
  %v371 = vld [vmem:[%s356 + $0x38] sm:$0xf]
  %v372 = vld [vmem:[%s356 + $0x3c] sm:$0xf]
  %v389 = vunpack.c.l.b16 %v357
  %v390 = vunpack.c.l.b16 %v358
  %v391 = vunpack.c.l.b16 %v359
  %v392 = vunpack.c.l.b16 %v360
  %v393 = vunpack.c.l.b16 %v361
  %v394 = vunpack.c.l.b16 %v362
  %v395 = vunpack.c.l.b16 %v363
  %v396 = vunpack.c.l.b16 %v364
  %v397 = vunpack.c.l.b16 %v365
  %v398 = vunpack.c.l.b16 %v366
  %v399 = vunpack.c.l.b16 %v367
  %v400 = vunpack.c.l.b16 %v368
  %v401 = vunpack.c.l.b16 %v369
  %v402 = vunpack.c.l.b16 %v370
  %v403 = vunpack.c.l.b16 %v371
  %v404 = vunpack.c.l.b16 %v372
  %v405 = vpack.c.b16 %v390, %v389
  %v406 = vpack.c.b16 %v392, %v391
  %v407 = vpack.c.b16 %v394, %v393
  %v408 = vpack.c.b16 %v396, %v395
  %v409 = vpack.c.b16 %v398, %v397
  %v410 = vpack.c.b16 %v400, %v399
  %v411 = vpack.c.b16 %v402, %v401
  %v412 = vpack.c.b16 %v404, %v403
  %421 = vmatprep.subr.bf16.mxu0 0
  %422 = vmatpush1.bf16.msra.mxu0 %v412
  %423 = vmatprep.subr.bf16.mxu0 0
  %424 = vmatpush1.bf16.msra.mxu0 %v411
  %425 = vmatprep.subr.bf16.mxu0 0
  %426 = vmatpush1.bf16.msra.mxu0 %v410
  %427 = vmatprep.subr.bf16.mxu0 0
  %428 = vmatpush1.bf16.msra.mxu0 %v409
  %429 = vmatprep.subr.bf16.mxu0 0
  %430 = vmatpush1.bf16.msra.mxu0 %v408
  %431 = vmatprep.subr.bf16.mxu0 0
  %432 = vmatpush1.bf16.msra.mxu0 %v407
  %433 = vmatprep.subr.bf16.mxu0 0
  %434 = vmatpush1.bf16.msra.mxu0 %v406
  %435 = vmatprep.subr.bf16.mxu0 0
  %436 = vmatpush1.bf16.msra.mxu0 %v405
  %437 = vmatprep.subr.bf16.mxu0 0
  %438 = vmatpush2.bf16.msra.mxu0 0
  %439 = vmatprep.subr.bf16.mxu0 0
  %440 = vmatpush2.bf16.msra.mxu0 0
  %441 = vmatprep.subr.bf16.mxu0 0
  %442 = vmatpush2.bf16.msra.mxu0 0
  %443 = vmatprep.subr.bf16.mxu0 0
  %444 = vmatpush2.bf16.msra.mxu0 0
  %445 = vmatprep.subr.bf16.mxu0 0
  %446 = vmatpush2.bf16.msra.mxu0 0
  %447 = vmatprep.subr.bf16.mxu0 0
  %448 = vmatpush2.bf16.msra.mxu0 0
  %449 = vmatprep.subr.bf16.mxu0 0
  %450 = vmatpush2.bf16.msra.mxu0 0
  %451 = vmatprep.subr.bf16.mxu0 0
  %452 = vmatpush2.bf16.msra.mxu0 0
  %453 = vmatprep.mubr.bf16.mxu0 0
  %454 = vmatmul.mubr.bf16.gmra.mxu0 %v355
  %v455 = vpop.f32.mrf.mxu0
  %v456 = vadd.f32 0.0, %v455
  %v457 = vpop.f32.mrf.mxu0
  %v458 = vpop.f32.mrf.mxu0
  %v459 = vadd.f32 0.0, %v458
  %v460 = vpop.f32.mrf.mxu0
  %461 = vdwg.mxu0
  %v462 = vpack.c.bf16 %v459, %v456
  %s463 = scalar_lea.vmem %s3, 2
  %v464 = vld [vmem:[%s463] sm:$0x1]
  %v466 = vlaneseq
  %v467 = vshrl.u32 %v466, 7
  %v468 = vsub.s32 0, %v467
  %v469 = vrot.slane %v464, %v468
  %471 = vmatprep.subr.bf16.mxu0 0
  %472 = vmatpush1.bf16.msra.mxu0 0
  %473 = vmatprep.subr.bf16.mxu0 0
  %474 = vmatpush1.bf16.msra.mxu0 0
  %475 = vmatprep.subr.bf16.mxu0 0
  %476 = vmatpush1.bf16.msra.mxu0 0
  %477 = vmatprep.subr.bf16.mxu0 0
  %478 = vmatpush1.bf16.msra.mxu0 0
  %479 = vmatprep.subr.bf16.mxu0 0
  %480 = vmatpush1.bf16.msra.mxu0 0
  %481 = vmatprep.subr.bf16.mxu0 0
  %482 = vmatpush1.bf16.msra.mxu0 0
  %483 = vmatprep.subr.bf16.mxu0 0
  %484 = vmatpush1.bf16.msra.mxu0 0
  %485 = vmatprep.subr.bf16.mxu0 0
  %486 = vmatpush1.bf16.msra.mxu0 %v462
  %487 = vmatprep.subr.bf16.mxu0 0
  %488 = vmatpush2.bf16.msra.mxu0 0
  %489 = vmatprep.subr.bf16.mxu0 0
  %490 = vmatpush2.bf16.msra.mxu0 0
  %491 = vmatprep.subr.bf16.mxu0 0
  %492 = vmatpush2.bf16.msra.mxu0 0
  %493 = vmatprep.subr.bf16.mxu0 0
  %494 = vmatpush2.bf16.msra.mxu0 0
  %495 = vmatprep.subr.bf16.mxu0 0
  %496 = vmatpush2.bf16.msra.mxu0 0
  %497 = vmatprep.subr.bf16.mxu0 0
  %498 = vmatpush2.bf16.msra.mxu0 0
  %499 = vmatprep.subr.bf16.mxu0 0
  %500 = vmatpush2.bf16.msra.mxu0 0
  %501 = vmatprep.subr.bf16.mxu0 0
  %502 = vmatpush2.bf16.msra.mxu0 0
  %503 = vmatprep.mubr.bf16.mxu0 0
  %504 = vmatmul.mubr.bf16.gmra.mxu0 %v151
  %v505 = vpop.f32.mrf.mxu0
  %v506 = vadd.f32 %v469, %v505
  %v507 = vpop.f32.mrf.mxu0
  %v508 = vpop.f32.mrf.mxu0
  %v509 = vadd.f32 %v469, %v508
  %v510 = vpop.f32.mrf.mxu0
  %511 = vdwg.mxu0
  %v512 = vld [vmem:[%s4] sm:$0x1]
  %v514 = vlaneseq
  %v515 = vshrl.u32 %v514, 7
  %v516 = vsub.s32 0, %v515
  %v517 = vrot.slane %v512, %v516
  %v519 = vadd.f32 %v506, %v517
  %v520 = vadd.f32 %v509, %v517
  %521 = vmax.xlane.f32.xlu0 %v519
  %v522 = vpop.xlane.xlu0 %521
  %523 = vmax.xlane.f32.xlu0 %v520
  %v524 = vpop.xlane.xlu0 %523
  %v525 = vsub.f32 %v519, %v522
  %v526 = vsub.f32 %v520, %v524
  %v527 = vmul.f32 %v525, 1.442695
  %v528 = vpow.pop %v527
  %v529 = vmul.f32 %v526, 1.442695
  %v530 = vpow.pop %v529
  %531 = vadd.xlane.f32.xlu0 %v528
  %v532 = vpop.xlane.xlu0 %531
  %533 = vadd.xlane.f32.xlu0 %v530
  %v534 = vpop.xlane.xlu0 %533
  %v535 = vlog2.pop %v532
  %v536 = vmul.f32 %v535, 0.6931472
  %v537 = vlog2.pop %v534
  %v538 = vmul.f32 %v537, 0.6931472
  %v539 = vadd.f32 %v536, %v522
  %v540 = vadd.f32 %v538, %v524
  %v541 = vsub.f32 %v519, %v539
  %v542 = vsub.f32 %v520, %v540
  %543 = vst [vmem:[%s5] sm:$0xff] %v541
  %544 = vst [vmem:[%s5 + $0x8] sm:$0xff] %v542
  // Predicated region
  $region22: #{gcn_forward.1} parent=0 // pred_check
    _
  $region23: #{gcn_forward.1} parent=0 // pred_check_branch
    %546 = sbr.rel (0) target = $region25
  $region24: #{gcn_forward.1} parent=0 // pred_region
    _
  $region25: #{gcn_forward.1} parent=0 // pred_fallthru
    _
  // Predicated region
  $region26: #{gcn_forward.1} parent=0 // pred_check
    _
  $region27: #{gcn_forward.1} parent=0 // pred_check_branch
    %548 = sbr.rel (0) target = $region29
  $region28: #{gcn_forward.1} parent=0 // pred_region
    _
  $region29: #{gcn_forward.1} parent=0 // pred_fallthru
    _

</llo_original>
